<compile_context>
chip_gen: v5e
topology: v5e:2x2
jax: 0.10.0
libtpu: 0.0.40
codegen_flags: <defaults>
</compile_context>

<pallas_src>
import jax
import jax.numpy as jnp
from jax.experimental import pallas as pl
from jax.experimental.pallas import tpu as pltpu

EPS = 1e-5


def _round_up(n, m):
    return ((n + m - 1) // m) * m


def forward(x, wa_t, wb_t, bias):
    N, Cin, H, W = x.shape
    Cout = wa_t.shape[0]
    Hp, Wp = H // 3, W // 3
    S1 = N * H * W                       # element count for BN stats
    S2 = N * Hp * Wp                     # pooled spatial size

    # ---- tile geometry: lane-dense blocks of pooled positions ---------------
    TS = min(512, _round_up(S2, 128))    # pooled positions per tile (x128)
    T = (S2 + TS - 1) // TS              # number of grid tiles
    S2pad = T * TS

    # ---- BN statistics from input moments (tiny XLA glue) -------------------
    # mean_v1 = wa@mu_x + bias ; var_v1 = diag(wa Cov_x wa^T).  Fold the
    # resulting per-channel affine normalization into the first conv.
    xf = x.reshape(N, Cin, H * W)
    inv_n = 1.0 / float(S1)
    sx = jnp.sum(xf, axis=(0, 2))                                   # (Cin,)
    sxx = jnp.einsum("ncs,nds->cd", xf, xf)                         # (Cin,Cin)
    mu_x = sx * inv_n
    cov_x = sxx * inv_n - jnp.outer(mu_x, mu_x)
    bn_mean = wa_t @ mu_x + bias                                    # (Cout,)
    bn_var = jnp.sum((wa_t @ cov_x) * wa_t, axis=1)                 # (Cout,)
    bn_istd = jax.lax.rsqrt(bn_var + EPS)
    wa_s = wa_t * bn_istd[:, None]                # conv1 weight with BN folded
    c0 = ((bias - bn_mean) * bn_istd).reshape(Cout, 1)   # folded bias/shift
    b2d = bias.reshape(Cout, 1)

    # ---- window-element-major, per-tile-contiguous input slab ---------------
    # group j (= window offset hi*3+wi) of tile t occupies lanes
    # [t*9*TS + j*TS, t*9*TS + (j+1)*TS).  Pad lanes are zero; they never
    # reach the output (sliced off) and BN stats come from the moments above.
    xc = x[:, :, : Hp * 3, : Wp * 3].reshape(N, Cin, Hp, 3, Wp, 3)
    xw = jnp.transpose(xc, (1, 3, 5, 0, 2, 4)).reshape(Cin, 9, S2)
    xw = jnp.pad(xw, ((0, 0), (0, 0), (0, S2pad - S2)))
    if T > 1:
        xw = xw.reshape(Cin, 9, T, TS).transpose(0, 2, 1, 3)
    xw = xw.reshape(Cin, T * 9 * TS)

    # ---- fused Pallas kernel (one tile of TS pooled positions per step) -----
    def kernel(xw_ref, was_ref, wb_ref, b_ref, c_ref, o_ref):
        xv = xw_ref[...]                                  # (Cin, 9*TS)
        wb = wb_ref[...]                                  # (Cout, Cout)
        b = b_ref[...]                                    # (Cout, 1)
        # conv1 + BatchNorm + ReLU, folded into one matmul + bias + relu
        v3 = jnp.maximum(
            jnp.dot(was_ref[...], xv, preferred_element_type=jnp.float32)
            + c_ref[...], 0.0)
        # conv on the window region
        v4 = jnp.dot(wb, v3, preferred_element_type=jnp.float32) + b
        # MaxPool2d(3): 9-way max over lane-aligned window-element groups
        p = v4[:, 0:TS]
        for j in range(1, 9):
            p = jnp.maximum(p, v4[:, j * TS:(j + 1) * TS])
        # conv -> relu -> conv -> relu -> sigmoid (exact)
        v7 = jnp.maximum(jnp.dot(wb, p, preferred_element_type=jnp.float32) + b, 0.0)
        v9 = jnp.maximum(jnp.dot(wb, v7, preferred_element_type=jnp.float32) + b, 0.0)
        o_ref[...] = 1.0 / (1.0 + jnp.exp(-v9))

    out2d = pl.pallas_call(
        kernel,
        out_shape=jax.ShapeDtypeStruct((Cout, T * TS), jnp.float32),
        grid=(T,),
        in_specs=[
            pl.BlockSpec((Cin, 9 * TS), lambda i: (0, i)),
            pl.BlockSpec((Cout, Cin), lambda i: (0, 0)),
            pl.BlockSpec((Cout, Cout), lambda i: (0, 0)),
            pl.BlockSpec((Cout, 1), lambda i: (0, 0)),
            pl.BlockSpec((Cout, 1), lambda i: (0, 0)),
        ],
        out_specs=pl.BlockSpec((Cout, TS), lambda i: (0, i)),
        compiler_params=pltpu.CompilerParams(
            dimension_semantics=("parallel",)),   # shards tiles across TCs (v7x)
    )(xw, wa_s, wb_t, b2d, c0)

    # drop lane padding, back to NCHW
    out = out2d[:, :S2].reshape(Cout, N, Hp, Wp)
    return jnp.transpose(out, (1, 0, 2, 3))


def reference(x, wa_t, wb_t, bias):
    # pure-JAX reference of the same dataflow
    N, Cin, H, W = x.shape
    b = bias[None, :, None, None]
    v1 = jnp.einsum("nchw,oc->nohw", x, wa_t) + b
    mean = jnp.mean(v1, axis=(0, 2, 3), keepdims=True)
    var = jnp.var(v1, axis=(0, 2, 3), keepdims=True)
    v2 = (v1 - mean) * jax.lax.rsqrt(var + EPS)
    v3 = jnp.maximum(v2, 0.0)
    v4 = jnp.einsum("nchw,oc->nohw", v3, wb_t) + b
    Hp, Wp = H // 3, W // 3
    v5 = jnp.max(v4[:, :, : Hp * 3, : Wp * 3].reshape(N, -1, Hp, 3, Wp, 3),
                 axis=(3, 5))
    v6 = jnp.einsum("nchw,oc->nohw", v5, wb_t) + b
    v7 = jnp.maximum(v6, 0.0)
    v8 = jnp.einsum("nchw,oc->nohw", v7, wb_t) + b
    v9 = jnp.maximum(v8, 0.0)
    return jax.nn.sigmoid(v9)


if __name__ == "__main__":
    key = jax.random.PRNGKey(0)
    kx, ka, kb, kc = jax.random.split(key, 4)

    N, Cin, Cout, H, W = 1, 3, 16, 32, 32
    x = jax.random.normal(kx, (N, Cin, H, W), dtype=jnp.float32)

    # ConvTranspose2d(3, 16, 1): weight (3, 16, 1, 1) used as a (3, 16)
    # pointwise map; bias (16,). Deterministic synthetic init.
    wa = jax.random.normal(ka, (Cin, Cout), dtype=jnp.float32) * 0.2
    bias = jax.random.normal(kc, (Cout,), dtype=jnp.float32) * 0.1
    # Synthetic weight for the reused conv applied to 16-channel activations.
    wb = jax.random.normal(kb, (Cout, Cout), dtype=jnp.float32) * 0.2

    wa_t = wa.T  # (16, 3)
    wb_t = wb.T  # (16, 16)

    fwd = jax.jit(forward)

    # spec shape (1, 3, 32, 32): single-tile path
    out = fwd(x, wa_t, wb_t, bias)
    jax.block_until_ready(out)
    ref = reference(x, wa_t, wb_t, bias)
    assert out.shape == (N, Cout, H // 3, W // 3), out.shape
    assert jnp.allclose(out, ref, atol=1e-2, rtol=1e-2), \
        float(jnp.max(jnp.abs(out - ref)))

    # larger shape exercising the multi-tile "parallel" spatial pipeline
    x2 = jax.random.normal(jax.random.PRNGKey(1), (2, Cin, 96, 96),
                           dtype=jnp.float32)
    out2 = fwd(x2, wa_t, wb_t, bias)
    jax.block_until_ready(out2)
    ref2 = reference(x2, wa_t, wb_t, bias)
    assert out2.shape == (2, Cout, 32, 32), out2.shape
    assert jnp.allclose(out2, ref2, atol=1e-2, rtol=1e-2), \
        float(jnp.max(jnp.abs(out2 - ref2)))

    print("KERNEL_OK")
</pallas_src>

<mosaic_0001>
module attributes {stable_mosaic.version = 11 : i64} {
  func.func @kernel(%arg0: i32, %arg1: memref<3x1152xf32, #tpu.memory_space<vmem>>, %arg2: memref<16x3xf32, #tpu.memory_space<vmem>>, %arg3: memref<16x16xf32, #tpu.memory_space<vmem>>, %arg4: memref<16x1xf32, #tpu.memory_space<vmem>>, %arg5: memref<16x1xf32, #tpu.memory_space<vmem>>, %arg6: memref<16x128xf32, #tpu.memory_space<vmem>>) attributes {dimension_semantics = [#tpu.dimension_semantics<parallel>], iteration_bounds = array<i64: 1>, scalar_prefetch = 0 : i64, scratch_operands = 0 : i64, tpu.core_type = #tpu.core_type<tc>, window_params = [{transform_indices = @transform_0, window_bounds = array<i64: 3, 1152>}, {pipeline_mode = #tpu.pipeline_mode<synchronous>, transform_indices = @transform_1, window_bounds = array<i64: 16, 3>}, {pipeline_mode = #tpu.pipeline_mode<synchronous>, transform_indices = @transform_2, window_bounds = array<i64: 16, 16>}, {pipeline_mode = #tpu.pipeline_mode<synchronous>, transform_indices = @transform_3, window_bounds = array<i64: 16, 1>}, {pipeline_mode = #tpu.pipeline_mode<synchronous>, transform_indices = @transform_4, window_bounds = array<i64: 16, 1>}, {transform_indices = @transform_5, window_bounds = array<i64: 16, 128>}]} {
    %c0 = arith.constant 0 : index
    %c0_0 = arith.constant 0 : index
    %0 = vector.load %arg1[%c0, %c0_0] : memref<3x1152xf32, #tpu.memory_space<vmem>>, vector<3x1152xf32>
    %c0_1 = arith.constant 0 : index
    %c0_2 = arith.constant 0 : index
    %1 = vector.load %arg3[%c0_1, %c0_2] : memref<16x16xf32, #tpu.memory_space<vmem>>, vector<16x16xf32>
    %c0_3 = arith.constant 0 : index
    %c0_4 = arith.constant 0 : index
    %2 = vector.load %arg4[%c0_3, %c0_4] : memref<16x1xf32, #tpu.memory_space<vmem>>, vector<16x1xf32>
    %c0_5 = arith.constant 0 : index
    %c0_6 = arith.constant 0 : index
    %3 = vector.load %arg2[%c0_5, %c0_6] : memref<16x3xf32, #tpu.memory_space<vmem>>, vector<16x3xf32>
    %cst = arith.constant dense<0.000000e+00> : vector<16x1152xf32>
    %4 = tpu.matmul %3, %0, %cst {dimension_numbers = #tpu.dot_dimension_numbers<[1], [0], [0], [1], [0, 0, 1, 1], [], []>} : vector<16x3xf32>, vector<3x1152xf32>, vector<16x1152xf32> -> vector<16x1152xf32>
    %c0_7 = arith.constant 0 : index
    %c0_8 = arith.constant 0 : index
    %5 = vector.load %arg5[%c0_7, %c0_8] : memref<16x1xf32, #tpu.memory_space<vmem>>, vector<16x1xf32>
    %6 = vector.broadcast %5 : vector<16x1xf32> to vector<16x1152xf32>
    %7 = arith.addf %4, %6 : vector<16x1152xf32>
    %cst_9 = arith.constant 0.000000e+00 : f32
    %8 = vector.broadcast %cst_9 : f32 to vector<16x1152xf32>
    %9 = arith.maximumf %7, %8 : vector<16x1152xf32>
    %cst_10 = arith.constant dense<0.000000e+00> : vector<16x1152xf32>
    %10 = tpu.matmul %1, %9, %cst_10 {dimension_numbers = #tpu.dot_dimension_numbers<[1], [0], [0], [1], [0, 0, 1, 1], [], []>} : vector<16x16xf32>, vector<16x1152xf32>, vector<16x1152xf32> -> vector<16x1152xf32>
    %11 = vector.broadcast %2 : vector<16x1xf32> to vector<16x1152xf32>
    %12 = arith.addf %10, %11 : vector<16x1152xf32>
    %13 = vector.extract_strided_slice %12 {offsets = [0, 0], sizes = [16, 128], strides = [1, 1]} : vector<16x1152xf32> to vector<16x128xf32>
    %14 = vector.extract_strided_slice %12 {offsets = [0, 128], sizes = [16, 128], strides = [1, 1]} : vector<16x1152xf32> to vector<16x128xf32>
    %15 = arith.maximumf %13, %14 : vector<16x128xf32>
    %16 = vector.extract_strided_slice %12 {offsets = [0, 256], sizes = [16, 128], strides = [1, 1]} : vector<16x1152xf32> to vector<16x128xf32>
    %17 = arith.maximumf %15, %16 : vector<16x128xf32>
    %18 = vector.extract_strided_slice %12 {offsets = [0, 384], sizes = [16, 128], strides = [1, 1]} : vector<16x1152xf32> to vector<16x128xf32>
    %19 = arith.maximumf %17, %18 : vector<16x128xf32>
    %20 = vector.extract_strided_slice %12 {offsets = [0, 512], sizes = [16, 128], strides = [1, 1]} : vector<16x1152xf32> to vector<16x128xf32>
    %21 = arith.maximumf %19, %20 : vector<16x128xf32>
    %22 = vector.extract_strided_slice %12 {offsets = [0, 640], sizes = [16, 128], strides = [1, 1]} : vector<16x1152xf32> to vector<16x128xf32>
    %23 = arith.maximumf %21, %22 : vector<16x128xf32>
    %24 = vector.extract_strided_slice %12 {offsets = [0, 768], sizes = [16, 128], strides = [1, 1]} : vector<16x1152xf32> to vector<16x128xf32>
    %25 = arith.maximumf %23, %24 : vector<16x128xf32>
    %26 = vector.extract_strided_slice %12 {offsets = [0, 896], sizes = [16, 128], strides = [1, 1]} : vector<16x1152xf32> to vector<16x128xf32>
    %27 = arith.maximumf %25, %26 : vector<16x128xf32>
    %28 = vector.extract_strided_slice %12 {offsets = [0, 1024], sizes = [16, 128], strides = [1, 1]} : vector<16x1152xf32> to vector<16x128xf32>
    %29 = arith.maximumf %27, %28 : vector<16x128xf32>
    %cst_11 = arith.constant dense<0.000000e+00> : vector<16x128xf32>
    %30 = tpu.matmul %1, %29, %cst_11 {dimension_numbers = #tpu.dot_dimension_numbers<[1], [0], [0], [1], [0, 0, 1, 1], [], []>} : vector<16x16xf32>, vector<16x128xf32>, vector<16x128xf32> -> vector<16x128xf32>
    %31 = vector.broadcast %2 : vector<16x1xf32> to vector<16x128xf32>
    %32 = arith.addf %30, %31 : vector<16x128xf32>
    %cst_12 = arith.constant 0.000000e+00 : f32
    %33 = vector.broadcast %cst_12 : f32 to vector<16x128xf32>
    %34 = arith.maximumf %32, %33 : vector<16x128xf32>
    %cst_13 = arith.constant dense<0.000000e+00> : vector<16x128xf32>
    %35 = tpu.matmul %1, %34, %cst_13 {dimension_numbers = #tpu.dot_dimension_numbers<[1], [0], [0], [1], [0, 0, 1, 1], [], []>} : vector<16x16xf32>, vector<16x128xf32>, vector<16x128xf32> -> vector<16x128xf32>
    %36 = vector.broadcast %2 : vector<16x1xf32> to vector<16x128xf32>
    %37 = arith.addf %35, %36 : vector<16x128xf32>
    %cst_14 = arith.constant 0.000000e+00 : f32
    %38 = vector.broadcast %cst_14 : f32 to vector<16x128xf32>
    %39 = arith.maximumf %37, %38 : vector<16x128xf32>
    %cst_15 = arith.constant 0.000000e+00 : f32
    %40 = vector.broadcast %cst_15 : f32 to vector<16x128xf32>
    %41 = arith.subf %40, %39 : vector<16x128xf32>
    %42 = math.exp %41 : vector<16x128xf32>
    %cst_16 = arith.constant 1.000000e+00 : f32
    %43 = vector.broadcast %cst_16 : f32 to vector<16x128xf32>
    %44 = arith.addf %43, %42 : vector<16x128xf32>
    %cst_17 = arith.constant 1.000000e+00 : f32
    %45 = vector.broadcast %cst_17 : f32 to vector<16x128xf32>
    %46 = arith.divf %45, %44 : vector<16x128xf32>
    %c0_18 = arith.constant 0 : index
    %c0_19 = arith.constant 0 : index
    %47 = vector.load %arg6[%c0_18, %c0_19] : memref<16x128xf32, #tpu.memory_space<vmem>>, vector<16x128xf32>
    tpu.vector_store %arg6[%c0_18, %c0_19], %46 {strides = array<i32>} : memref<16x128xf32, #tpu.memory_space<vmem>>, vector<16x128xf32>,
    return
  }
  func.func @transform_0(%arg0: i32) -> (i32, i32) {
    %c0_i32 = arith.constant 0 : i32
    %c0_i32_0 = arith.constant 0 : i32
    return %c0_i32, %arg0 : i32, i32
  }
  func.func @transform_1(%arg0: i32) -> (i32, i32) {
    %c0_i32 = arith.constant 0 : i32
    %c0_i32_0 = arith.constant 0 : i32
    %c0_i32_1 = arith.constant 0 : i32
    return %c0_i32, %c0_i32_0 : i32, i32
  }
  func.func @transform_2(%arg0: i32) -> (i32, i32) {
    %c0_i32 = arith.constant 0 : i32
    %c0_i32_0 = arith.constant 0 : i32
    %c0_i32_1 = arith.constant 0 : i32
    return %c0_i32, %c0_i32_0 : i32, i32
  }
  func.func @transform_3(%arg0: i32) -> (i32, i32) {
    %c0_i32 = arith.constant 0 : i32
    %c0_i32_0 = arith.constant 0 : i32
    %c0_i32_1 = arith.constant 0 : i32
    return %c0_i32, %c0_i32_0 : i32, i32
  }
  func.func @transform_4(%arg0: i32) -> (i32, i32) {
    %c0_i32 = arith.constant 0 : i32
    %c0_i32_0 = arith.constant 0 : i32
    %c0_i32_1 = arith.constant 0 : i32
    return %c0_i32, %c0_i32_0 : i32, i32
  }
  func.func @transform_5(%arg0: i32) -> (i32, i32) {
    %c0_i32 = arith.constant 0 : i32
    %c0_i32_0 = arith.constant 0 : i32
    return %c0_i32, %arg0 : i32, i32
  }
}

</mosaic_0001>

<llo_original>
// kernel: forward.1
$region0: #{forward.1}
  #allocation0 [shape = 'u32[]', space=smem, size = 0x4, offset = 0x4, fixed_abs, tag = 'smem constant byte address 0x4 - core index']
  #allocation1 [shape = 'u32[72,128]{1,0:T(1,128)}', space=vmem, size = 0x9000, scoped, tag = 'internal scratch']
  %s0 = inlined_call_operand.vmem [shape: f32[3,1152], index: 0, kind: input, shape index: {}]
  %s1 = inlined_call_operand.vmem [shape: f32[16,3], index: 1, kind: input, shape index: {}]
  %s2 = inlined_call_operand.vmem [shape: f32[16,16], index: 2, kind: input, shape index: {}]
  %s3 = inlined_call_operand.vmem [shape: f32[16,1], index: 3, kind: input, shape index: {}]
  %s4 = inlined_call_operand.vmem [shape: f32[16,1], index: 4, kind: input, shape index: {}]
  %s5 = inlined_call_operand.vmem [shape: f32[16,128], index: 5, kind: output, shape index: {}]
  %s6 = sld [smem:[#allocation0]]
  $region30: #{forward.1} parent=0
    _
  %s8 = ssub.s32 1, %s6
  %s9 = scalar_select 0, %s8, %s6
  // Predicated region
  $region2: #{forward.1} parent=0 // pred_check
    _
  $region3: #{forward.1} parent=0 // pred_check_branch
    %11 = sbr.rel (0) target = $region5
  $region4: #{forward.1} parent=0 // pred_region
    _
  $region5: #{forward.1} parent=0 // pred_fallthru
    _
  // Predicated region
  $region6: #{forward.1} parent=0 // pred_check
    _
  $region7: #{forward.1} parent=0 // pred_check_branch
    %13 = sbr.rel (0) target = $region9
  $region8: #{forward.1} parent=0 // pred_region
    _
  $region9: #{forward.1} parent=0 // pred_fallthru
    _
  // Predicated region
  $region10: #{forward.1} parent=0 // pred_check
    _
  $region11: #{forward.1} parent=0 // pred_check_branch
    %15 = sbr.rel (0) target = $region13
  $region12: #{forward.1} parent=0 // pred_region
    _
  $region13: #{forward.1} parent=0 // pred_fallthru
    _
  // Predicated region
  $region14: #{forward.1} parent=0 // pred_check
    _
  $region15: #{forward.1} parent=0 // pred_check_branch
    %17 = sbr.rel (0) target = $region17
  $region16: #{forward.1} parent=0 // pred_region
    _
  $region17: #{forward.1} parent=0 // pred_fallthru
    _
  // Predicated region
  $region18: #{forward.1} parent=0 // pred_check
    _
  $region19: #{forward.1} parent=0 // pred_check_branch
    %19 = sbr.rel (0) target = $region21
  $region20: #{forward.1} parent=0 // pred_region
    _
  $region21: #{forward.1} parent=0 // pred_fallthru
    _
  %v20 = vld [vmem:[%s0] sm:$0x77]
  %v21 = vld [vmem:[%s0 + $0x8] sm:$0x77]
  %v22 = vld [vmem:[%s0 + $0x10] sm:$0x77]
  %v23 = vld [vmem:[%s0 + $0x18] sm:$0x77]
  %v24 = vld [vmem:[%s0 + $0x20] sm:$0x7]
  %v25 = vld [vmem:[%s2] sm:$0xff]
  %v26 = vld [vmem:[%s2 + $0x8] sm:$0xff]
  %v27 = vld [vmem:[%s3] sm:$0xff]
  %v28 = vld [vmem:[%s3 + $0x8] sm:$0xff]
  %v29 = vld [vmem:[%s1] sm:$0xff]
  %v30 = vld [vmem:[%s1 + $0x8] sm:$0xff]
  %v31 = vld [vmem:[%s4] sm:$0xff]
  %v32 = vld [vmem:[%s4 + $0x8] sm:$0xff]
  %34 = vset.pattern.permute.xlu0 0
  %35 = vperm.xlu0 %34, %v31
  %v36 = vpop.permute.xlu0 %35
  %39 = vset.pattern.permute.xlu0 0
  %40 = vperm.xlu0 %39, %v32
  %v41 = vpop.permute.xlu0 %40
  %48 = vst [vmem:[#allocation1] ss:$2 sm:$0xff] %v20
  %s49 = scalar_lea.vmem [#allocation1], 16
  %50 = vst [vmem:[%s49] ss:$2 sm:$0xff] %v21
  %s51 = scalar_lea.vmem [#allocation1], 32
  %52 = vst [vmem:[%s51] ss:$2 sm:$0xff] %v22
  %s53 = scalar_lea.vmem [#allocation1], 48
  %54 = vst [vmem:[%s53] ss:$2 sm:$0xff] %v23
  %v55 = vld.sshfl [vmem:[#allocation1] sm:$0xff pattern:$0x75316420]
  %v56 = vld.sshfl [vmem:[#allocation1 + $0x8] sm:$0xff pattern:$0x75316420]
  %v57 = vld.sshfl [vmem:[#allocation1 + $0x10] sm:$0xff pattern:$0x75316420]
  %v58 = vld.sshfl [vmem:[#allocation1 + $0x18] sm:$0xff pattern:$0x75316420]
  %v59 = vld.sshfl [vmem:[#allocation1 + $0x20] sm:$0xff pattern:$0x75316420]
  %v60 = vld.sshfl [vmem:[#allocation1 + $0x28] sm:$0xff pattern:$0x75316420]
  %v61 = vld.sshfl [vmem:[#allocation1 + $0x30] sm:$0xff pattern:$0x75316420]
  %v62 = vld.sshfl [vmem:[#allocation1 + $0x38] sm:$0xff pattern:$0x75316420]
  %63 = vst [vmem:[#allocation1] ss:$2 sm:$0xff] %v24
  %v64 = vld.sshfl [vmem:[#allocation1] sm:$0xff pattern:$0x75316420]
  %vm65 = vcmask 23552
  %v67 = vsel %vm65, %v29, 0
  %v70 = vsel %vm65, %v30, 0
  %vm72 = vcmask 1042432
  %v73 = vsel %vm72, %v55, 0
  %v75 = vsel %vm72, %v56, 0
  %v77 = vsel %vm72, %v57, 0
  %v79 = vsel %vm72, %v58, 0
  %v81 = vsel %vm72, %v59, 0
  %v83 = vsel %vm72, %v60, 0
  %v85 = vsel %vm72, %v61, 0
  %v87 = vsel %vm72, %v62, 0
  %v89 = vsel %vm72, %v64, 0
  %91 = vmatpush.msra.mxu0 0.0
  %92 = vmatpush.msra.mxu0 0.0
  %93 = vmatpush.msra.mxu0 0.0
  %94 = vmatpush.msra.mxu0 0.0
  %95 = vmatpush.msra.mxu0 0.0
  %96 = vmatpush.msra.mxu0 0.0
  %97 = vmatpush.msra.mxu0 0.0
  %98 = vmatpush.msra.mxu0 0.0
  %99 = vmatpush.msra.mxu0 0.0
  %100 = vmatpush.msra.mxu0 0.0
  %101 = vmatpush.msra.mxu0 0.0
  %102 = vmatpush.msra.mxu0 0.0
  %103 = vmatpush.msra.mxu0 0.0
  %104 = vmatpush.msra.mxu0 0.0
  %105 = vmatpush.msra.mxu0 0.0
  %106 = vmatpush.msra.mxu0 %v73
  %107 = vmatmul.f32.gmra.mxu0 %v67
  %v108 = vpop.f32.mrf.mxu0
  %v109 = vadd.f32 %v36, %v108
  %110 = vmatmul.f32.gmra.mxu0 %v70
  %v111 = vpop.f32.mrf.mxu0
  %v112 = vadd.f32 %v41, %v111
  %113 = vdwg.mxu0
  %114 = vmatpush.msra.mxu0 0.0
  %115 = vmatpush.msra.mxu0 0.0
  %116 = vmatpush.msra.mxu0 0.0
  %117 = vmatpush.msra.mxu0 0.0
  %118 = vmatpush.msra.mxu0 0.0
  %119 = vmatpush.msra.mxu0 0.0
  %120 = vmatpush.msra.mxu0 0.0
  %121 = vmatpush.msra.mxu0 0.0
  %122 = vmatpush.msra.mxu0 0.0
  %123 = vmatpush.msra.mxu0 0.0
  %124 = vmatpush.msra.mxu0 0.0
  %125 = vmatpush.msra.mxu0 0.0
  %126 = vmatpush.msra.mxu0 0.0
  %127 = vmatpush.msra.mxu0 0.0
  %128 = vmatpush.msra.mxu0 0.0
  %129 = vmatpush.msra.mxu0 %v75
  %130 = vmatmul.f32.gmra.mxu0 %v67
  %v131 = vpop.f32.mrf.mxu0
  %v132 = vadd.f32 %v36, %v131
  %133 = vmatmul.f32.gmra.mxu0 %v70
  %v134 = vpop.f32.mrf.mxu0
  %v135 = vadd.f32 %v41, %v134
  %136 = vdwg.mxu0
  %137 = vmatpush.msra.mxu0 0.0
  %138 = vmatpush.msra.mxu0 0.0
  %139 = vmatpush.msra.mxu0 0.0
  %140 = vmatpush.msra.mxu0 0.0
  %141 = vmatpush.msra.mxu0 0.0
  %142 = vmatpush.msra.mxu0 0.0
  %143 = vmatpush.msra.mxu0 0.0
  %144 = vmatpush.msra.mxu0 0.0
  %145 = vmatpush.msra.mxu0 0.0
  %146 = vmatpush.msra.mxu0 0.0
  %147 = vmatpush.msra.mxu0 0.0
  %148 = vmatpush.msra.mxu0 0.0
  %149 = vmatpush.msra.mxu0 0.0
  %150 = vmatpush.msra.mxu0 0.0
  %151 = vmatpush.msra.mxu0 0.0
  %152 = vmatpush.msra.mxu0 %v77
  %153 = vmatmul.f32.gmra.mxu0 %v67
  %v154 = vpop.f32.mrf.mxu0
  %v155 = vadd.f32 %v36, %v154
  %156 = vmatmul.f32.gmra.mxu0 %v70
  %v157 = vpop.f32.mrf.mxu0
  %v158 = vadd.f32 %v41, %v157
  %159 = vdwg.mxu0
  %160 = vmatpush.msra.mxu0 0.0
  %161 = vmatpush.msra.mxu0 0.0
  %162 = vmatpush.msra.mxu0 0.0
  %163 = vmatpush.msra.mxu0 0.0
  %164 = vmatpush.msra.mxu0 0.0
  %165 = vmatpush.msra.mxu0 0.0
  %166 = vmatpush.msra.mxu0 0.0
  %167 = vmatpush.msra.mxu0 0.0
  %168 = vmatpush.msra.mxu0 0.0
  %169 = vmatpush.msra.mxu0 0.0
  %170 = vmatpush.msra.mxu0 0.0
  %171 = vmatpush.msra.mxu0 0.0
  %172 = vmatpush.msra.mxu0 0.0
  %173 = vmatpush.msra.mxu0 0.0
  %174 = vmatpush.msra.mxu0 0.0
  %175 = vmatpush.msra.mxu0 %v79
  %176 = vmatmul.f32.gmra.mxu0 %v67
  %v177 = vpop.f32.mrf.mxu0
  %v178 = vadd.f32 %v36, %v177
  %179 = vmatmul.f32.gmra.mxu0 %v70
  %v180 = vpop.f32.mrf.mxu0
  %v181 = vadd.f32 %v41, %v180
  %182 = vdwg.mxu0
  %183 = vmatpush.msra.mxu0 0.0
  %184 = vmatpush.msra.mxu0 0.0
  %185 = vmatpush.msra.mxu0 0.0
  %186 = vmatpush.msra.mxu0 0.0
  %187 = vmatpush.msra.mxu0 0.0
  %188 = vmatpush.msra.mxu0 0.0
  %189 = vmatpush.msra.mxu0 0.0
  %190 = vmatpush.msra.mxu0 0.0
  %191 = vmatpush.msra.mxu0 0.0
  %192 = vmatpush.msra.mxu0 0.0
  %193 = vmatpush.msra.mxu0 0.0
  %194 = vmatpush.msra.mxu0 0.0
  %195 = vmatpush.msra.mxu0 0.0
  %196 = vmatpush.msra.mxu0 0.0
  %197 = vmatpush.msra.mxu0 0.0
  %198 = vmatpush.msra.mxu0 %v81
  %199 = vmatmul.f32.gmra.mxu0 %v67
  %v200 = vpop.f32.mrf.mxu0
  %v201 = vadd.f32 %v36, %v200
  %202 = vmatmul.f32.gmra.mxu0 %v70
  %v203 = vpop.f32.mrf.mxu0
  %v204 = vadd.f32 %v41, %v203
  %205 = vdwg.mxu0
  %206 = vmatpush.msra.mxu0 0.0
  %207 = vmatpush.msra.mxu0 0.0
  %208 = vmatpush.msra.mxu0 0.0
  %209 = vmatpush.msra.mxu0 0.0
  %210 = vmatpush.msra.mxu0 0.0
  %211 = vmatpush.msra.mxu0 0.0
  %212 = vmatpush.msra.mxu0 0.0
  %213 = vmatpush.msra.mxu0 0.0
  %214 = vmatpush.msra.mxu0 0.0
  %215 = vmatpush.msra.mxu0 0.0
  %216 = vmatpush.msra.mxu0 0.0
  %217 = vmatpush.msra.mxu0 0.0
  %218 = vmatpush.msra.mxu0 0.0
  %219 = vmatpush.msra.mxu0 0.0
  %220 = vmatpush.msra.mxu0 0.0
  %221 = vmatpush.msra.mxu0 %v83
  %222 = vmatmul.f32.gmra.mxu0 %v67
  %v223 = vpop.f32.mrf.mxu0
  %v224 = vadd.f32 %v36, %v223
  %225 = vmatmul.f32.gmra.mxu0 %v70
  %v226 = vpop.f32.mrf.mxu0
  %v227 = vadd.f32 %v41, %v226
  %228 = vdwg.mxu0
  %229 = vmatpush.msra.mxu0 0.0
  %230 = vmatpush.msra.mxu0 0.0
  %231 = vmatpush.msra.mxu0 0.0
  %232 = vmatpush.msra.mxu0 0.0
  %233 = vmatpush.msra.mxu0 0.0
  %234 = vmatpush.msra.mxu0 0.0
  %235 = vmatpush.msra.mxu0 0.0
  %236 = vmatpush.msra.mxu0 0.0
  %237 = vmatpush.msra.mxu0 0.0
  %238 = vmatpush.msra.mxu0 0.0
  %239 = vmatpush.msra.mxu0 0.0
  %240 = vmatpush.msra.mxu0 0.0
  %241 = vmatpush.msra.mxu0 0.0
  %242 = vmatpush.msra.mxu0 0.0
  %243 = vmatpush.msra.mxu0 0.0
  %244 = vmatpush.msra.mxu0 %v85
  %245 = vmatmul.f32.gmra.mxu0 %v67
  %v246 = vpop.f32.mrf.mxu0
  %v247 = vadd.f32 %v36, %v246
  %248 = vmatmul.f32.gmra.mxu0 %v70
  %v249 = vpop.f32.mrf.mxu0
  %v250 = vadd.f32 %v41, %v249
  %251 = vdwg.mxu0
  %252 = vmatpush.msra.mxu0 0.0
  %253 = vmatpush.msra.mxu0 0.0
  %254 = vmatpush.msra.mxu0 0.0
  %255 = vmatpush.msra.mxu0 0.0
  %256 = vmatpush.msra.mxu0 0.0
  %257 = vmatpush.msra.mxu0 0.0
  %258 = vmatpush.msra.mxu0 0.0
  %259 = vmatpush.msra.mxu0 0.0
  %260 = vmatpush.msra.mxu0 0.0
  %261 = vmatpush.msra.mxu0 0.0
  %262 = vmatpush.msra.mxu0 0.0
  %263 = vmatpush.msra.mxu0 0.0
  %264 = vmatpush.msra.mxu0 0.0
  %265 = vmatpush.msra.mxu0 0.0
  %266 = vmatpush.msra.mxu0 0.0
  %267 = vmatpush.msra.mxu0 %v87
  %268 = vmatmul.f32.gmra.mxu0 %v67
  %v269 = vpop.f32.mrf.mxu0
  %v270 = vadd.f32 %v36, %v269
  %271 = vmatmul.f32.gmra.mxu0 %v70
  %v272 = vpop.f32.mrf.mxu0
  %v273 = vadd.f32 %v41, %v272
  %274 = vdwg.mxu0
  %275 = vmatpush.msra.mxu0 0.0
  %276 = vmatpush.msra.mxu0 0.0
  %277 = vmatpush.msra.mxu0 0.0
  %278 = vmatpush.msra.mxu0 0.0
  %279 = vmatpush.msra.mxu0 0.0
  %280 = vmatpush.msra.mxu0 0.0
  %281 = vmatpush.msra.mxu0 0.0
  %282 = vmatpush.msra.mxu0 0.0
  %283 = vmatpush.msra.mxu0 0.0
  %284 = vmatpush.msra.mxu0 0.0
  %285 = vmatpush.msra.mxu0 0.0
  %286 = vmatpush.msra.mxu0 0.0
  %287 = vmatpush.msra.mxu0 0.0
  %288 = vmatpush.msra.mxu0 0.0
  %289 = vmatpush.msra.mxu0 0.0
  %290 = vmatpush.msra.mxu0 %v89
  %291 = vmatmul.f32.gmra.mxu0 %v67
  %v292 = vpop.f32.mrf.mxu0
  %v293 = vadd.f32 %v36, %v292
  %294 = vmatmul.f32.gmra.mxu0 %v70
  %v295 = vpop.f32.mrf.mxu0
  %v296 = vadd.f32 %v41, %v295
  %297 = vdwg.mxu0
  %v298 = vmax.f32 %v109, 0.0
  %v299 = vmax.f32 %v132, 0.0
  %v300 = vmax.f32 %v155, 0.0
  %v301 = vmax.f32 %v178, 0.0
  %v302 = vmax.f32 %v201, 0.0
  %v303 = vmax.f32 %v224, 0.0
  %v304 = vmax.f32 %v247, 0.0
  %v305 = vmax.f32 %v270, 0.0
  %v306 = vmax.f32 %v293, 0.0
  %v307 = vmax.f32 %v112, 0.0
  %v308 = vmax.f32 %v135, 0.0
  %v309 = vmax.f32 %v158, 0.0
  %v310 = vmax.f32 %v181, 0.0
  %v311 = vmax.f32 %v204, 0.0
  %v312 = vmax.f32 %v227, 0.0
  %v313 = vmax.f32 %v250, 0.0
  %v314 = vmax.f32 %v273, 0.0
  %v315 = vmax.f32 %v296, 0.0
  %317 = vset.pattern.permute.xlu0 0
  %318 = vperm.xlu0 %317, %v27
  %v319 = vpop.permute.xlu0 %318
  %322 = vset.pattern.permute.xlu0 0
  %323 = vperm.xlu0 %322, %v28
  %v324 = vpop.permute.xlu0 %323
  %vm326 = vcmask 130048
  %v328 = vsel %vm326, %v25, 0
  %v331 = vsel %vm326, %v26, 0
  %333 = vmatpush.msra.mxu0 0.0
  %334 = vmatpush.msra.mxu0 0.0
  %335 = vmatpush.msra.mxu0 0.0
  %336 = vmatpush.msra.mxu0 0.0
  %337 = vmatpush.msra.mxu0 0.0
  %338 = vmatpush.msra.mxu0 0.0
  %339 = vmatpush.msra.mxu0 0.0
  %340 = vmatpush.msra.mxu0 0.0
  %341 = vmatpush.msra.mxu0 0.0
  %342 = vmatpush.msra.mxu0 0.0
  %343 = vmatpush.msra.mxu0 0.0
  %344 = vmatpush.msra.mxu0 0.0
  %345 = vmatpush.msra.mxu0 0.0
  %346 = vmatpush.msra.mxu0 0.0
  %347 = vmatpush.msra.mxu0 %v307
  %348 = vmatpush.msra.mxu0 %v298
  %349 = vmatmul.f32.gmra.mxu0 %v328
  %v350 = vpop.f32.mrf.mxu0
  %v351 = vadd.f32 %v319, %v350
  %352 = vmatmul.f32.gmra.mxu0 %v331
  %v353 = vpop.f32.mrf.mxu0
  %v354 = vadd.f32 %v324, %v353
  %355 = vdwg.mxu0
  %356 = vmatpush.msra.mxu0 0.0
  %357 = vmatpush.msra.mxu0 0.0
  %358 = vmatpush.msra.mxu0 0.0
  %359 = vmatpush.msra.mxu0 0.0
  %360 = vmatpush.msra.mxu0 0.0
  %361 = vmatpush.msra.mxu0 0.0
  %362 = vmatpush.msra.mxu0 0.0
  %363 = vmatpush.msra.mxu0 0.0
  %364 = vmatpush.msra.mxu0 0.0
  %365 = vmatpush.msra.mxu0 0.0
  %366 = vmatpush.msra.mxu0 0.0
  %367 = vmatpush.msra.mxu0 0.0
  %368 = vmatpush.msra.mxu0 0.0
  %369 = vmatpush.msra.mxu0 0.0
  %370 = vmatpush.msra.mxu0 %v308
  %371 = vmatpush.msra.mxu0 %v299
  %372 = vmatmul.f32.gmra.mxu0 %v328
  %v373 = vpop.f32.mrf.mxu0
  %v374 = vadd.f32 %v319, %v373
  %375 = vmatmul.f32.gmra.mxu0 %v331
  %v376 = vpop.f32.mrf.mxu0
  %v377 = vadd.f32 %v324, %v376
  %378 = vdwg.mxu0
  %379 = vmatpush.msra.mxu0 0.0
  %380 = vmatpush.msra.mxu0 0.0
  %381 = vmatpush.msra.mxu0 0.0
  %382 = vmatpush.msra.mxu0 0.0
  %383 = vmatpush.msra.mxu0 0.0
  %384 = vmatpush.msra.mxu0 0.0
  %385 = vmatpush.msra.mxu0 0.0
  %386 = vmatpush.msra.mxu0 0.0
  %387 = vmatpush.msra.mxu0 0.0
  %388 = vmatpush.msra.mxu0 0.0
  %389 = vmatpush.msra.mxu0 0.0
  %390 = vmatpush.msra.mxu0 0.0
  %391 = vmatpush.msra.mxu0 0.0
  %392 = vmatpush.msra.mxu0 0.0
  %393 = vmatpush.msra.mxu0 %v309
  %394 = vmatpush.msra.mxu0 %v300
  %395 = vmatmul.f32.gmra.mxu0 %v328
  %v396 = vpop.f32.mrf.mxu0
  %v397 = vadd.f32 %v319, %v396
  %398 = vmatmul.f32.gmra.mxu0 %v331
  %v399 = vpop.f32.mrf.mxu0
  %v400 = vadd.f32 %v324, %v399
  %401 = vdwg.mxu0
  %402 = vmatpush.msra.mxu0 0.0
  %403 = vmatpush.msra.mxu0 0.0
  %404 = vmatpush.msra.mxu0 0.0
  %405 = vmatpush.msra.mxu0 0.0
  %406 = vmatpush.msra.mxu0 0.0
  %407 = vmatpush.msra.mxu0 0.0
  %408 = vmatpush.msra.mxu0 0.0
  %409 = vmatpush.msra.mxu0 0.0
  %410 = vmatpush.msra.mxu0 0.0
  %411 = vmatpush.msra.mxu0 0.0
  %412 = vmatpush.msra.mxu0 0.0
  %413 = vmatpush.msra.mxu0 0.0
  %414 = vmatpush.msra.mxu0 0.0
  %415 = vmatpush.msra.mxu0 0.0
  %416 = vmatpush.msra.mxu0 %v310
  %417 = vmatpush.msra.mxu0 %v301
  %418 = vmatmul.f32.gmra.mxu0 %v328
  %v419 = vpop.f32.mrf.mxu0
  %v420 = vadd.f32 %v319, %v419
  %421 = vmatmul.f32.gmra.mxu0 %v331
  %v422 = vpop.f32.mrf.mxu0
  %v423 = vadd.f32 %v324, %v422
  %424 = vdwg.mxu0
  %425 = vmatpush.msra.mxu0 0.0
  %426 = vmatpush.msra.mxu0 0.0
  %427 = vmatpush.msra.mxu0 0.0
  %428 = vmatpush.msra.mxu0 0.0
  %429 = vmatpush.msra.mxu0 0.0
  %430 = vmatpush.msra.mxu0 0.0
  %431 = vmatpush.msra.mxu0 0.0
  %432 = vmatpush.msra.mxu0 0.0
  %433 = vmatpush.msra.mxu0 0.0
  %434 = vmatpush.msra.mxu0 0.0
  %435 = vmatpush.msra.mxu0 0.0
  %436 = vmatpush.msra.mxu0 0.0
  %437 = vmatpush.msra.mxu0 0.0
  %438 = vmatpush.msra.mxu0 0.0
  %439 = vmatpush.msra.mxu0 %v311
  %440 = vmatpush.msra.mxu0 %v302
  %441 = vmatmul.f32.gmra.mxu0 %v328
  %v442 = vpop.f32.mrf.mxu0
  %v443 = vadd.f32 %v319, %v442
  %444 = vmatmul.f32.gmra.mxu0 %v331
  %v445 = vpop.f32.mrf.mxu0
  %v446 = vadd.f32 %v324, %v445
  %447 = vdwg.mxu0
  %448 = vmatpush.msra.mxu0 0.0
  %449 = vmatpush.msra.mxu0 0.0
  %450 = vmatpush.msra.mxu0 0.0
  %451 = vmatpush.msra.mxu0 0.0
  %452 = vmatpush.msra.mxu0 0.0
  %453 = vmatpush.msra.mxu0 0.0
  %454 = vmatpush.msra.mxu0 0.0
  %455 = vmatpush.msra.mxu0 0.0
  %456 = vmatpush.msra.mxu0 0.0
  %457 = vmatpush.msra.mxu0 0.0
  %458 = vmatpush.msra.mxu0 0.0
  %459 = vmatpush.msra.mxu0 0.0
  %460 = vmatpush.msra.mxu0 0.0
  %461 = vmatpush.msra.mxu0 0.0
  %462 = vmatpush.msra.mxu0 %v312
  %463 = vmatpush.msra.mxu0 %v303
  %464 = vmatmul.f32.gmra.mxu0 %v328
  %v465 = vpop.f32.mrf.mxu0
  %v466 = vadd.f32 %v319, %v465
  %467 = vmatmul.f32.gmra.mxu0 %v331
  %v468 = vpop.f32.mrf.mxu0
  %v469 = vadd.f32 %v324, %v468
  %470 = vdwg.mxu0
  %471 = vmatpush.msra.mxu0 0.0
  %472 = vmatpush.msra.mxu0 0.0
  %473 = vmatpush.msra.mxu0 0.0
  %474 = vmatpush.msra.mxu0 0.0
  %475 = vmatpush.msra.mxu0 0.0
  %476 = vmatpush.msra.mxu0 0.0
  %477 = vmatpush.msra.mxu0 0.0
  %478 = vmatpush.msra.mxu0 0.0
  %479 = vmatpush.msra.mxu0 0.0
  %480 = vmatpush.msra.mxu0 0.0
  %481 = vmatpush.msra.mxu0 0.0
  %482 = vmatpush.msra.mxu0 0.0
  %483 = vmatpush.msra.mxu0 0.0
  %484 = vmatpush.msra.mxu0 0.0
  %485 = vmatpush.msra.mxu0 %v313
  %486 = vmatpush.msra.mxu0 %v304
  %487 = vmatmul.f32.gmra.mxu0 %v328
  %v488 = vpop.f32.mrf.mxu0
  %v489 = vadd.f32 %v319, %v488
  %490 = vmatmul.f32.gmra.mxu0 %v331
  %v491 = vpop.f32.mrf.mxu0
  %v492 = vadd.f32 %v324, %v491
  %493 = vdwg.mxu0
  %494 = vmatpush.msra.mxu0 0.0
  %495 = vmatpush.msra.mxu0 0.0
  %496 = vmatpush.msra.mxu0 0.0
  %497 = vmatpush.msra.mxu0 0.0
  %498 = vmatpush.msra.mxu0 0.0
  %499 = vmatpush.msra.mxu0 0.0
  %500 = vmatpush.msra.mxu0 0.0
  %501 = vmatpush.msra.mxu0 0.0
  %502 = vmatpush.msra.mxu0 0.0
  %503 = vmatpush.msra.mxu0 0.0
  %504 = vmatpush.msra.mxu0 0.0
  %505 = vmatpush.msra.mxu0 0.0
  %506 = vmatpush.msra.mxu0 0.0
  %507 = vmatpush.msra.mxu0 0.0
  %508 = vmatpush.msra.mxu0 %v314
  %509 = vmatpush.msra.mxu0 %v305
  %510 = vmatmul.f32.gmra.mxu0 %v328
  %v511 = vpop.f32.mrf.mxu0
  %v512 = vadd.f32 %v319, %v511
  %513 = vmatmul.f32.gmra.mxu0 %v331
  %v514 = vpop.f32.mrf.mxu0
  %v515 = vadd.f32 %v324, %v514
  %516 = vdwg.mxu0
  %517 = vmatpush.msra.mxu0 0.0
  %518 = vmatpush.msra.mxu0 0.0
  %519 = vmatpush.msra.mxu0 0.0
  %520 = vmatpush.msra.mxu0 0.0
  %521 = vmatpush.msra.mxu0 0.0
  %522 = vmatpush.msra.mxu0 0.0
  %523 = vmatpush.msra.mxu0 0.0
  %524 = vmatpush.msra.mxu0 0.0
  %525 = vmatpush.msra.mxu0 0.0
  %526 = vmatpush.msra.mxu0 0.0
  %527 = vmatpush.msra.mxu0 0.0
  %528 = vmatpush.msra.mxu0 0.0
  %529 = vmatpush.msra.mxu0 0.0
  %530 = vmatpush.msra.mxu0 0.0
  %531 = vmatpush.msra.mxu0 %v315
  %532 = vmatpush.msra.mxu0 %v306
  %533 = vmatmul.f32.gmra.mxu0 %v328
  %v534 = vpop.f32.mrf.mxu0
  %v535 = vadd.f32 %v319, %v534
  %536 = vmatmul.f32.gmra.mxu0 %v331
  %v537 = vpop.f32.mrf.mxu0
  %v538 = vadd.f32 %v324, %v537
  %539 = vdwg.mxu0
  %v540 = vmax.f32 %v351, %v374
  %v541 = vmax.f32 %v354, %v377
  %v542 = vmax.f32 %v540, %v397
  %v543 = vmax.f32 %v541, %v400
  %v544 = vmax.f32 %v542, %v420
  %v545 = vmax.f32 %v543, %v423
  %v546 = vmax.f32 %v544, %v443
  %v547 = vmax.f32 %v545, %v446
  %v548 = vmax.f32 %v546, %v466
  %v549 = vmax.f32 %v547, %v469
  %v550 = vmax.f32 %v548, %v489
  %v551 = vmax.f32 %v549, %v492
  %v552 = vmax.f32 %v550, %v512
  %v553 = vmax.f32 %v551, %v515
  %v554 = vmax.f32 %v552, %v535
  %v555 = vmax.f32 %v553, %v538
  %556 = vmatpush.msra.mxu0 0.0
  %557 = vmatpush.msra.mxu0 0.0
  %558 = vmatpush.msra.mxu0 0.0
  %559 = vmatpush.msra.mxu0 0.0
  %560 = vmatpush.msra.mxu0 0.0
  %561 = vmatpush.msra.mxu0 0.0
  %562 = vmatpush.msra.mxu0 0.0
  %563 = vmatpush.msra.mxu0 0.0
  %564 = vmatpush.msra.mxu0 0.0
  %565 = vmatpush.msra.mxu0 0.0
  %566 = vmatpush.msra.mxu0 0.0
  %567 = vmatpush.msra.mxu0 0.0
  %568 = vmatpush.msra.mxu0 0.0
  %569 = vmatpush.msra.mxu0 0.0
  %570 = vmatpush.msra.mxu0 %v555
  %571 = vmatpush.msra.mxu0 %v554
  %572 = vmatmul.f32.gmra.mxu0 %v328
  %v573 = vpop.f32.mrf.mxu0
  %v574 = vadd.f32 %v319, %v573
  %575 = vmatmul.f32.gmra.mxu0 %v331
  %v576 = vpop.f32.mrf.mxu0
  %v577 = vadd.f32 %v324, %v576
  %578 = vdwg.mxu0
  %v579 = vmax.f32 %v574, 0.0
  %v580 = vmax.f32 %v577, 0.0
  %581 = vmatpush.msra.mxu0 0.0
  %582 = vmatpush.msra.mxu0 0.0
  %583 = vmatpush.msra.mxu0 0.0
  %584 = vmatpush.msra.mxu0 0.0
  %585 = vmatpush.msra.mxu0 0.0
  %586 = vmatpush.msra.mxu0 0.0
  %587 = vmatpush.msra.mxu0 0.0
  %588 = vmatpush.msra.mxu0 0.0
  %589 = vmatpush.msra.mxu0 0.0
  %590 = vmatpush.msra.mxu0 0.0
  %591 = vmatpush.msra.mxu0 0.0
  %592 = vmatpush.msra.mxu0 0.0
  %593 = vmatpush.msra.mxu0 0.0
  %594 = vmatpush.msra.mxu0 0.0
  %595 = vmatpush.msra.mxu0 %v580
  %596 = vmatpush.msra.mxu0 %v579
  %597 = vmatmul.f32.gmra.mxu0 %v328
  %v598 = vpop.f32.mrf.mxu0
  %v599 = vadd.f32 %v319, %v598
  %600 = vmatmul.f32.gmra.mxu0 %v331
  %v601 = vpop.f32.mrf.mxu0
  %v602 = vadd.f32 %v324, %v601
  %603 = vdwg.mxu0
  %v604 = vmax.f32 %v599, 0.0
  %v605 = vmax.f32 %v602, 0.0
  %v606 = vsub.f32 0.0, %v604
  %v607 = vsub.f32 0.0, %v605
  %v608 = vmul.f32 %v606, 1.442695
  %v609 = vpow.pop %v608
  %v610 = vmul.f32 %v607, 1.442695
  %v611 = vpow.pop %v610
  %v612 = vadd.f32 %v609, 1.0
  %v613 = vadd.f32 %v611, 1.0
  %v614 = vrcp.pop %v612
  %v615 = vmul.f32 %v612, %v614
  %v616 = vsub.f32 1.0, %v615
  %v617 = vmul.f32 %v614, %v616
  %v618 = vadd.f32 %v614, %v617
  %vm619 = vweird.f32 %v612
  %vm620 = vweird.f32 %v614
  %vm621 = vmor %vm619, %vm620
  %v622 = vsel %vm621, %v614, %v618
  %v623 = vand.u32 2147483647, %v612
  %vm624 = vcmp.eq.f32.partialorder %v623, 8.507059e+37
  %v625 = vand.u32 %v612, 2147483648
  %v626 = vor.u32 1.1754944e-38, %v625
  %v627 = vsel %vm624, %v626, %v622
  %v628 = vmul.f32 1.0, %v627
  %v629 = vrcp.pop %v613
  %v630 = vmul.f32 %v613, %v629
  %v631 = vsub.f32 1.0, %v630
  %v632 = vmul.f32 %v629, %v631
  %v633 = vadd.f32 %v629, %v632
  %vm634 = vweird.f32 %v613
  %vm635 = vweird.f32 %v629
  %vm636 = vmor %vm634, %vm635
  %v637 = vsel %vm636, %v629, %v633
  %v638 = vand.u32 2147483647, %v613
  %vm639 = vcmp.eq.f32.partialorder %v638, 8.507059e+37
  %v640 = vand.u32 %v613, 2147483648
  %v641 = vor.u32 1.1754944e-38, %v640
  %v642 = vsel %vm639, %v641, %v637
  %v643 = vmul.f32 1.0, %v642
  %644 = vst [vmem:[%s5] sm:$0xff] %v628
  %645 = vst [vmem:[%s5 + $0x8] sm:$0xff] %v643
  // Predicated region
  $region22: #{forward.1} parent=0 // pred_check
    _
  $region23: #{forward.1} parent=0 // pred_check_branch
    %647 = sbr.rel (0) target = $region25
  $region24: #{forward.1} parent=0 // pred_region
    _
  $region25: #{forward.1} parent=0 // pred_fallthru
    _
  // Predicated region
  $region26: #{forward.1} parent=0 // pred_check
    _
  $region27: #{forward.1} parent=0 // pred_check_branch
    %649 = sbr.rel (0) target = $region29
  $region28: #{forward.1} parent=0 // pred_region
    _
  $region29: #{forward.1} parent=0 // pred_fallthru
    _

</llo_original>
